<compile_context>
chip_gen: v5e
topology: v5e:2x2
jax: 0.10.0
libtpu: 0.0.40
codegen_flags: <defaults>
</compile_context>

<pallas_src>
import functools

import jax
import jax.numpy as jnp
from jax.experimental import pallas as pl
from jax.experimental.pallas import tpu as pltpu


def _gated_attn_kernel(x_ref, wab_ref, bab_ref, wc_ref, bc_ref, out_ref, *, dp):
    # bf16 MXU operands, f32 accumulation.  x may arrive f32 (cheap in-VMEM
    # cast) or already bf16 (half-width HBM stream); wab is already bf16.
    x = x_ref[...].astype(jnp.bfloat16)                           # (TN, L)
    h = jnp.dot(x, wab_ref[...], preferred_element_type=jnp.float32)
    h = h + bab_ref[...]                                          # (TN, 2Dp) f32

    # dp is a multiple of 128 -> both halves are lane-aligned slices (free).
    a = jnp.tanh(h[:, :dp])                                       # EUP
    b = jax.nn.sigmoid(h[:, dp:])                                 # EUP
    gated = a * b                                                 # VPU, f32

    # attention_c (sampled BayesLinear D -> C), computed transposed so the
    # output store is lane-dense along N:
    #   out_t[c, n] = sum_d wc[c, d] * gated[n, d] + bc[c]
    out_t = jax.lax.dot_general(
        wc_ref[...], gated,
        dimension_numbers=(((1,), (1,)), ((), ())),               # contract Dp
        preferred_element_type=jnp.float32,
    ) + bc_ref[...]                                               # (C, TN)

    out_ref[...] = out_t.astype(out_ref.dtype)


def bayes_attn_net_gated(x, wa, ba, wb, bb, wc, bc, *, tile_n=None):
    """Gated-attention head forward.

    x: (N, L) f32 or bf16; wa/wb: (L, D); ba/bb: (1, D);
    wc: (D, C) sampled Bayes weight; bc: (1, C) sampled Bayes bias.
    Returns (N, C) float32, matching the PyTorch module's forward (dropout=0).
    """
    N, L = x.shape
    D = wa.shape[1]
    C = wc.shape[1]

    # Lane-align the a/b split (and fill the MXU output width): pad each
    # gating projection to Dp = round_up(D, 128) zero columns.  Exact: padded
    # columns give tanh(0)=0 -> gated=0, and wc is zero-padded on those rows.
    dp = pl.cdiv(D, 128) * 128
    pad = dp - D
    if pad:
        wa = jnp.pad(wa, ((0, 0), (0, pad)))
        wb = jnp.pad(wb, ((0, 0), (0, pad)))
        ba = jnp.pad(ba, ((0, 0), (0, pad)))
        bb = jnp.pad(bb, ((0, 0), (0, pad)))
        wc = jnp.pad(wc, ((0, pad), (0, 0)))
    wab = jnp.concatenate([wa, wb], axis=1).astype(jnp.bfloat16)   # (L, 2Dp) MXU operand
    bab = jnp.concatenate([ba, bb], axis=1).astype(jnp.float32)    # (1, 2Dp)
    wc_cd = wc.T.astype(jnp.float32)                               # (C, Dp)
    bc_c1 = bc.T.astype(jnp.float32)                               # (C, 1)

    # Per-generation VMEM budget / default tile size (v5e/v6e 128 MiB, v7x 64 MiB).
    try:
        vmem_cap = pltpu.get_tpu_info().vmem_capacity_bytes
    except Exception:
        vmem_cap = 64 << 20
    vmem_limit = int(vmem_cap) * 3 // 4
    if tile_n is None:
        tile_n = 2048 if vmem_cap >= (96 << 20) else 1024

    # Tile N.  No wrapper-side padding of x (would cost a full extra HBM round
    # trip); Pallas clips the final partial block, and garbage rows in that
    # block only affect output columns that are clipped on store.
    if N <= 256:
        tn = N                          # single full-extent block (always legal)
    else:
        # multiple of 128; aim for >= 2 tiles so both v7x TensorCores get work
        tn = max(128, min(int(tile_n), pl.cdiv(pl.cdiv(N, 2), 128) * 128))
    grid = (pl.cdiv(N, tn),)

    out_t = pl.pallas_call(
        functools.partial(_gated_attn_kernel, dp=dp),
        out_shape=jax.ShapeDtypeStruct((C, N), jnp.float32),
        grid=grid,
        in_specs=[
            pl.BlockSpec((tn, L), lambda i: (i, 0)),         # x: streamed over N
            pl.BlockSpec((L, 2 * dp), lambda i: (0, 0)),     # fused Wa|Wb (bf16, resident)
            pl.BlockSpec((1, 2 * dp), lambda i: (0, 0)),     # fused ba|bb (resident)
            pl.BlockSpec((C, dp), lambda i: (0, 0)),         # sampled Wc  (resident)
            pl.BlockSpec((C, 1), lambda i: (0, 0)),          # sampled bc  (resident)
        ],
        out_specs=pl.BlockSpec((C, tn), lambda i: (0, i)),   # lane-dense along N
        compiler_params=pltpu.CompilerParams(
            dimension_semantics=("parallel",),               # megacore-shard N tiles
            vmem_limit_bytes=vmem_limit,
        ),
    )(x, wab, bab, wc_cd, bc_c1)

    return out_t.T                                           # (N, C)


# ----------------------------- references ----------------------------------

def _reference_f32(x, wa, ba, wb, bb, wc, bc):
    a = jnp.tanh(x @ wa + ba)
    b = jax.nn.sigmoid(x @ wb + bb)
    return (a * b) @ wc + bc


def _reference_bf16_matmul(x, wa, ba, wb, bb, wc, bc):
    # Mirrors the kernel's deliberate precision choice (bf16 MXU operands with
    # f32 accumulation; f32 activations) for a tight plumbing check.
    xb = x.astype(jnp.bfloat16)
    a = jnp.tanh(jnp.dot(xb, wa.astype(jnp.bfloat16),
                         preferred_element_type=jnp.float32) + ba)
    b = jax.nn.sigmoid(jnp.dot(xb, wb.astype(jnp.bfloat16),
                               preferred_element_type=jnp.float32) + bb)
    return (a * b) @ wc + bc


def _make_params(key, L, D, C, bayes_std=0.1):
    keys = jax.random.split(key, 7)
    wa = jax.random.normal(keys[0], (L, D), jnp.float32) / jnp.sqrt(L)
    ba = jax.random.normal(keys[1], (1, D), jnp.float32) * 0.01
    wb = jax.random.normal(keys[2], (L, D), jnp.float32) / jnp.sqrt(L)
    bb = jax.random.normal(keys[3], (1, D), jnp.float32) * 0.01
    # BayesLinear(prior_mu=0, prior_sigma=bayes_std, D, C): sampled weight
    # = mu + exp(log_sigma) * eps, eps ~ N(0,1).  Sampled once per call in the
    # wrapper; the sampled linear runs inside the kernel.
    wc_mu = jax.random.normal(keys[4], (D, C), jnp.float32) / jnp.sqrt(D)
    wc = wc_mu + jnp.exp(jnp.full((D, C), jnp.log(bayes_std), jnp.float32)) * \
        jax.random.normal(keys[5], (D, C), jnp.float32)
    bc = jnp.exp(jnp.full((1, C), jnp.log(bayes_std), jnp.float32)) * \
        jax.random.normal(keys[6], (1, C), jnp.float32)
    return wa, ba, wb, bb, wc, bc


if __name__ == "__main__":
    key = jax.random.PRNGKey(0)

    # Small shapes consistent with the module's forward (x is (N, L)).
    # Case 0: tiny single-block bag.
    # Case 1: multi-tile grid with a partial final block, D needing lane
    #         padding, and C > 1.
    cases = [
        (8, 32, 16, 1, None),
        (300, 64, 48, 2, 128),
    ]

    for idx, (N, L, D, C, tile_n) in enumerate(cases):
        kx, kp, key = jax.random.split(key, 3)
        x = jax.random.normal(kx, (N, L), jnp.float32)
        wa, ba, wb, bb, wc, bc = _make_params(kp, L, D, C)

        out = bayes_attn_net_gated(x, wa, ba, wb, bb, wc, bc, tile_n=tile_n)
        out = jax.block_until_ready(out)
        assert out.shape == (N, C), (idx, out.shape)

        ref_tight = _reference_bf16_matmul(x, wa, ba, wb, bb, wc, bc)
        ref_f32 = _reference_f32(x, wa, ba, wb, bb, wc, bc)
        assert jnp.allclose(out, ref_tight, atol=1e-3, rtol=1e-3), \
            f"case {idx}: mismatch vs bf16-matched reference"
        assert jnp.allclose(out, ref_f32, atol=5e-2, rtol=5e-2), \
            f"case {idx}: drift vs f32 reference"

    print("KERNEL_OK")
</pallas_src>

<mosaic_0001>
module attributes {stable_mosaic.version = 11 : i64} {
  func.func @_gated_attn_kernel(%arg0: i32, %arg1: memref<8x32xf32, #tpu.memory_space<vmem>>, %arg2: memref<32x256xbf16, #tpu.memory_space<vmem>>, %arg3: memref<1x256xf32, #tpu.memory_space<vmem>>, %arg4: memref<1x128xf32, #tpu.memory_space<vmem>>, %arg5: memref<1x1xf32, #tpu.memory_space<vmem>>, %arg6: memref<1x8xf32, #tpu.memory_space<vmem>>) attributes {dimension_semantics = [#tpu.dimension_semantics<parallel>], iteration_bounds = array<i64: 1>, scalar_prefetch = 0 : i64, scratch_operands = 0 : i64, tpu.core_type = #tpu.core_type<tc>, window_params = [{transform_indices = @transform_0, window_bounds = array<i64: 8, 32>}, {pipeline_mode = #tpu.pipeline_mode<synchronous>, transform_indices = @transform_1, window_bounds = array<i64: 32, 256>}, {pipeline_mode = #tpu.pipeline_mode<synchronous>, transform_indices = @transform_2, window_bounds = array<i64: 1, 256>}, {pipeline_mode = #tpu.pipeline_mode<synchronous>, transform_indices = @transform_3, window_bounds = array<i64: 1, 128>}, {pipeline_mode = #tpu.pipeline_mode<synchronous>, transform_indices = @transform_4, window_bounds = array<i64: 1, 1>}, {transform_indices = @transform_5, window_bounds = array<i64: 1, 8>}]} {
    %c0 = arith.constant 0 : index
    %c0_0 = arith.constant 0 : index
    %0 = vector.load %arg1[%c0, %c0_0] : memref<8x32xf32, #tpu.memory_space<vmem>>, vector<8x32xf32>
    %1 = arith.truncf %0 : vector<8x32xf32> to vector<8x32xbf16>
    %c0_1 = arith.constant 0 : index
    %c0_2 = arith.constant 0 : index
    %2 = vector.load %arg2[%c0_1, %c0_2] : memref<32x256xbf16, #tpu.memory_space<vmem>>, vector<32x256xbf16>
    %cst = arith.constant dense<0.000000e+00> : vector<8x256xf32>
    %3 = tpu.matmul %1, %2, %cst {dimension_numbers = #tpu.dot_dimension_numbers<[1], [0], [0], [1], [0, 0, 1, 1], [], []>} : vector<8x32xbf16>, vector<32x256xbf16>, vector<8x256xf32> -> vector<8x256xf32>
    %c0_3 = arith.constant 0 : index
    %c0_4 = arith.constant 0 : index
    %4 = vector.load %arg3[%c0_3, %c0_4] : memref<1x256xf32, #tpu.memory_space<vmem>>, vector<1x256xf32>
    %5 = vector.broadcast %4 : vector<1x256xf32> to vector<8x256xf32>
    %6 = arith.addf %3, %5 : vector<8x256xf32>
    %7 = vector.extract_strided_slice %6 {offsets = [0, 0], sizes = [8, 128], strides = [1, 1]} : vector<8x256xf32> to vector<8x128xf32>
    %8 = math.tanh %7 : vector<8x128xf32>
    %9 = vector.extract_strided_slice %6 {offsets = [0, 128], sizes = [8, 128], strides = [1, 1]} : vector<8x256xf32> to vector<8x128xf32>
    %10 = arith.negf %9 : vector<8x128xf32>
    %11 = math.exp %10 : vector<8x128xf32>
    %cst_5 = arith.constant 1.000000e+00 : f32
    %12 = vector.broadcast %cst_5 : f32 to vector<8x128xf32>
    %13 = arith.addf %12, %11 : vector<8x128xf32>
    %14 = arith.divf %12, %13 : vector<8x128xf32>
    %15 = arith.mulf %8, %14 : vector<8x128xf32>
    %c0_6 = arith.constant 0 : index
    %c0_7 = arith.constant 0 : index
    %16 = vector.load %arg4[%c0_6, %c0_7] : memref<1x128xf32, #tpu.memory_space<vmem>>, vector<1x128xf32>
    %cst_8 = arith.constant dense<0.000000e+00> : vector<1x8xf32>
    %17 = tpu.matmul %16, %15, %cst_8 {dimension_numbers = #tpu.dot_dimension_numbers<[1], [1], [0], [0], [0, 0, 1, 0], [], []>} : vector<1x128xf32>, vector<8x128xf32>, vector<1x8xf32> -> vector<1x8xf32>
    %c0_9 = arith.constant 0 : index
    %c0_10 = arith.constant 0 : index
    %18 = vector.load %arg5[%c0_9, %c0_10] : memref<1x1xf32, #tpu.memory_space<vmem>>, vector<1x1xf32>
    %19 = vector.broadcast %18 : vector<1x1xf32> to vector<1x8xf32>
    %20 = arith.addf %17, %19 : vector<1x8xf32>
    %c0_11 = arith.constant 0 : index
    %c0_12 = arith.constant 0 : index
    %21 = vector.load %arg6[%c0_11, %c0_12] : memref<1x8xf32, #tpu.memory_space<vmem>>, vector<1x8xf32>
    tpu.vector_store %arg6[%c0_11, %c0_12], %20 {strides = array<i32>} : memref<1x8xf32, #tpu.memory_space<vmem>>, vector<1x8xf32>,
    return
  }
  func.func @transform_0(%arg0: i32) -> (i32, i32) {
    %c0_i32 = arith.constant 0 : i32
    %c0_i32_0 = arith.constant 0 : i32
    return %arg0, %c0_i32 : i32, i32
  }
  func.func @transform_1(%arg0: i32) -> (i32, i32) {
    %c0_i32 = arith.constant 0 : i32
    %c0_i32_0 = arith.constant 0 : i32
    %c0_i32_1 = arith.constant 0 : i32
    return %c0_i32, %c0_i32_0 : i32, i32
  }
  func.func @transform_2(%arg0: i32) -> (i32, i32) {
    %c0_i32 = arith.constant 0 : i32
    %c0_i32_0 = arith.constant 0 : i32
    %c0_i32_1 = arith.constant 0 : i32
    return %c0_i32, %c0_i32_0 : i32, i32
  }
  func.func @transform_3(%arg0: i32) -> (i32, i32) {
    %c0_i32 = arith.constant 0 : i32
    %c0_i32_0 = arith.constant 0 : i32
    %c0_i32_1 = arith.constant 0 : i32
    return %c0_i32, %c0_i32_0 : i32, i32
  }
  func.func @transform_4(%arg0: i32) -> (i32, i32) {
    %c0_i32 = arith.constant 0 : i32
    %c0_i32_0 = arith.constant 0 : i32
    %c0_i32_1 = arith.constant 0 : i32
    return %c0_i32, %c0_i32_0 : i32, i32
  }
  func.func @transform_5(%arg0: i32) -> (i32, i32) {
    %c0_i32 = arith.constant 0 : i32
    %c0_i32_0 = arith.constant 0 : i32
    return %c0_i32, %arg0 : i32, i32
  }
}

</mosaic_0001>

<llo_original>
// kernel: tpu_custom_call.1
$region0: #{tpu_custom_call.1}
  #allocation0 [shape = 'u32[]', space=smem, size = 0x4, offset = 0x4, fixed_abs, tag = 'smem constant byte address 0x4 - core index']
  #allocation1 [shape = 'u32[72,128]{1,0:T(1,128)}', space=vmem, size = 0x9000, scoped, tag = 'internal scratch']
  #allocation2 [shape = 'f32[1,1]{1,0:T(1,128)S(1)}', space=vmem, size = 0x200, scoped, tag = 'scoped memory for tpu_custom_call.1']
  %s0 = inlined_call_operand.hbm [shape: f32[8,32], index: 0, kind: input, shape index: {}]
  %s1 = inlined_call_operand.hbm [shape: bf16[32,256], index: 1, kind: input, shape index: {}]
  %s2 = inlined_call_operand.vmem [shape: f32[1,256], index: 2, kind: input, shape index: {}]
  %s3 = inlined_call_operand.vmem [shape: f32[1,128], index: 3, kind: input, shape index: {}]
  %s4 = inlined_call_operand.<no memory space> [shape: f32[1,1], index: 4, kind: input, shape index: {}]
  %s5 = inlined_call_operand.hbm [shape: f32[1,8], index: 5, kind: output, shape index: {}]
  %s6 = sld [smem:[#allocation0]]
  $region38: #{tpu_custom_call.1} parent=0
    _
  %s8 = ssub.s32 1, %s6
  %s9 = scalar_select 0, %s8, %s6
  %v10 = vstv %s4
  %11 = vst [vmem:[#allocation2] sm:$0x1] %v10
  $region1: #{tpu_custom_call.1} parent=0
    #allocation3 [shape = 'u8[4096]{0}', space=vmem, size = 0x1000, scoped, tag = 'input window, operand 0, single buffered']
    #allocation4 [shape = 's32[1]{0}', space=sflag, size = 0x4, scoped, tag = 'scoped memory for tpu_custom_call.1']
    #allocation5 [shape = 's32[1]{0}', space=sflag, size = 0x4, scoped, tag = 'scoped memory for tpu_custom_call.1']
    #allocation6 [shape = 'u8[16384]{0}', space=vmem, size = 0x4000, scoped, tag = 'input window, operand 1, single buffered']
    #allocation7 [shape = 's32[1]{0}', space=sflag, size = 0x4, scoped, tag = 'scoped memory for tpu_custom_call.1']
    #allocation8 [shape = 'u8[512]{0}', space=vmem, size = 0x400, scoped, tag = 'output window, operand 0, single buffered']
    %12 = vsyncpa [#allocation4], 0
    %13 = vsyncpa [#allocation7], 0
    %14 = vsyncpa [#allocation5], 0
    // Predicated region
    $region2: #{tpu_custom_call.1} parent=1 // pred_check
      _
    $region3: #{tpu_custom_call.1} parent=1 // pred_check_branch
      %16 = sbr.rel (0) target = $region5
    $region4: #{tpu_custom_call.1} parent=1 // pred_region
      %18 = vsyncadd [#allocation4], 0
      %s20 = sshll.u32 %s0, 4
      %s21 = int_to_ptr.hbm [resolvable:$true] %s20
      %s22 = sshll.u32 [#allocation3], 4
      %s23 = int_to_ptr.vmem [resolvable:$true] %s22
      %25 = dma.hbm_to_vmem [thread:$0]  %s21, 128, %s23, [#allocation4]
    $region5: #{tpu_custom_call.1} parent=1 // pred_fallthru
      _
    // Predicated region
    $region6: #{tpu_custom_call.1} parent=1 // pred_check
      _
    $region7: #{tpu_custom_call.1} parent=1 // pred_check_branch
      %27 = sbr.rel (0) target = $region9
    $region8: #{tpu_custom_call.1} parent=1 // pred_region
      %29 = vsyncadd [#allocation7], 0
      %s30 = sshll.u32 %s1, 4
      %s31 = int_to_ptr.hbm [resolvable:$true] %s30
      %s32 = sshll.u32 [#allocation6], 4
      %s33 = int_to_ptr.vmem [resolvable:$true] %s32
      %38 = dma.hbm_to_vmem [thread:$0]  %s31, 512, %s33, [#allocation7], 128, 128, 8
    $region9: #{tpu_custom_call.1} parent=1 // pred_fallthru
      _
    // Predicated region
    $region10: #{tpu_custom_call.1} parent=1 // pred_check
      _
    $region11: #{tpu_custom_call.1} parent=1 // pred_check_branch
      %40 = sbr.rel (0) target = $region13
    $region12: #{tpu_custom_call.1} parent=1 // pred_region
      _
    $region13: #{tpu_custom_call.1} parent=1 // pred_fallthru
      _
    // Predicated region
    $region14: #{tpu_custom_call.1} parent=1 // pred_check
      _
    $region15: #{tpu_custom_call.1} parent=1 // pred_check_branch
      %42 = sbr.rel (0) target = $region17
    $region16: #{tpu_custom_call.1} parent=1 // pred_region
      _
    $region17: #{tpu_custom_call.1} parent=1 // pred_fallthru
      _
    // Predicated region
    $region18: #{tpu_custom_call.1} parent=1 // pred_check
      _
    $region19: #{tpu_custom_call.1} parent=1 // pred_check_branch
      %44 = sbr.rel (0) target = $region21
    $region20: #{tpu_custom_call.1} parent=1 // pred_region
      _
    $region21: #{tpu_custom_call.1} parent=1 // pred_fallthru
      _
    // Predicated region
    $region22: #{tpu_custom_call.1} parent=1 // pred_check
      _
    $region23: #{tpu_custom_call.1} parent=1 // pred_check_branch
      %46 = sbr.rel (0) target = $region25
    $region24: #{tpu_custom_call.1} parent=1 // pred_region
      %48 = dma.done [#allocation4], 128
    $region25: #{tpu_custom_call.1} parent=1 // pred_fallthru
      _
    // Predicated region
    $region26: #{tpu_custom_call.1} parent=1 // pred_check
      _
    $region27: #{tpu_custom_call.1} parent=1 // pred_check_branch
      %50 = sbr.rel (0) target = $region29
    $region28: #{tpu_custom_call.1} parent=1 // pred_region
      %52 = dma.done [#allocation7], 512
    $region29: #{tpu_custom_call.1} parent=1 // pred_fallthru
      _
    %v54 = vld [vmem:[#allocation3] sm:$0xff]
    %v55 = vpack.c.bf16 %v54, %v54
    %v56 = vld [vmem:[#allocation6] sm:$0xff]
    %v57 = vld [vmem:[#allocation6 + $0x8] sm:$0xff]
    %v58 = vld [vmem:[#allocation6 + $0x10] sm:$0xff]
    %v59 = vld [vmem:[#allocation6 + $0x18] sm:$0xff]
    %v60 = vld [vmem:[%s2] sm:$0x3]
    %v62 = vperm.slane %v60, 0
    %v63 = vperm.slane %v60, 1
    %v70 = vunpack.c.l.b16 %v56
    %v71 = vunpack.c.h.b16 %v56
    %v72 = vunpack.c.l.b16 %v57
    %v73 = vunpack.c.h.b16 %v57
    %v74 = vunpack.c.l.b16 %v58
    %v75 = vunpack.c.h.b16 %v58
    %v76 = vunpack.c.l.b16 %v59
    %v77 = vunpack.c.h.b16 %v59
    %v78 = vpack.c.b16 %v72, %v70
    %v79 = vpack.c.b16 %v73, %v71
    %v80 = vpack.c.b16 %v76, %v74
    %v81 = vpack.c.b16 %v77, %v75
    %vm86 = vcmask 261120
    %v88 = vsel %vm86, %v55, 0
    %90 = vmatpush.bf16.msra.mxu0 0
    %91 = vmatpush.bf16.msra.mxu0 0
    %92 = vmatpush.bf16.msra.mxu0 0
    %93 = vmatpush.bf16.msra.mxu0 0
    %94 = vmatpush.bf16.msra.mxu0 0
    %95 = vmatpush.bf16.msra.mxu0 0
    %96 = vmatpush.bf16.msra.mxu0 %v80
    %97 = vmatpush.bf16.msra.mxu0 %v78
    %98 = vmatmul.bf16.gmra.mxu0 %v88
    %v99 = vpop.f32.mrf.mxu0
    %v100 = vadd.f32 %v62, %v99
    %v101 = vpop.f32.mrf.mxu0
    %102 = vdwg.mxu0
    %103 = vmatpush.bf16.msra.mxu0 0
    %104 = vmatpush.bf16.msra.mxu0 0
    %105 = vmatpush.bf16.msra.mxu0 0
    %106 = vmatpush.bf16.msra.mxu0 0
    %107 = vmatpush.bf16.msra.mxu0 0
    %108 = vmatpush.bf16.msra.mxu0 0
    %109 = vmatpush.bf16.msra.mxu0 %v81
    %110 = vmatpush.bf16.msra.mxu0 %v79
    %111 = vmatmul.bf16.gmra.mxu0 %v88
    %v112 = vpop.f32.mrf.mxu0
    %v113 = vadd.f32 %v63, %v112
    %v114 = vpop.f32.mrf.mxu0
    %115 = vdwg.mxu0
    %v116 = vtanh.pop %v100
    %v117 = vxor.u32 %v113, 2147483648
    %v118 = vmul.f32 %v117, 1.442695
    %v119 = vpow.pop %v118
    %v120 = vadd.f32 %v119, 1.0
    %v121 = vrcp.pop %v120
    %v122 = vmul.f32 %v120, %v121
    %v123 = vsub.f32 1.0, %v122
    %v124 = vmul.f32 %v121, %v123
    %v125 = vadd.f32 %v121, %v124
    %vm126 = vweird.f32 %v120
    %vm127 = vweird.f32 %v121
    %vm128 = vmor %vm126, %vm127
    %v129 = vsel %vm128, %v121, %v125
    %v130 = vand.u32 2147483647, %v120
    %vm131 = vcmp.eq.f32.partialorder %v130, 8.507059e+37
    %v132 = vand.u32 %v120, 2147483648
    %v133 = vor.u32 1.1754944e-38, %v132
    %v134 = vsel %vm131, %v133, %v129
    %v135 = vmul.f32 1.0, %v134
    %v136 = vmul.f32 %v116, %v135
    %v137 = vld [vmem:[%s3] sm:$0x1]
    %v138 = vld [vmem:[#allocation2] sm:$0x1]
    %140 = vset.pattern.permute.xlu0 0
    %141 = vperm.xlu0 %140, %v138
    %v142 = vpop.permute.xlu0 %141
    %v144 = vperm.slane %v142, 0
    %145 = vmatpush.xpose.msra.mxu0 0.0
    %146 = vmatpush.xpose.msra.mxu0 0.0
    %147 = vmatpush.xpose.msra.mxu0 0.0
    %148 = vmatpush.xpose.msra.mxu0 0.0
    %149 = vmatpush.xpose.msra.mxu0 0.0
    %150 = vmatpush.xpose.msra.mxu0 0.0
    %151 = vmatpush.xpose.msra.mxu0 0.0
    %152 = vmatpush.xpose.msra.mxu0 0.0
    %153 = vmatpush.xpose.msra.mxu0 0.0
    %154 = vmatpush.xpose.msra.mxu0 0.0
    %155 = vmatpush.xpose.msra.mxu0 0.0
    %156 = vmatpush.xpose.msra.mxu0 0.0
    %157 = vmatpush.xpose.msra.mxu0 0.0
    %158 = vmatpush.xpose.msra.mxu0 0.0
    %159 = vmatpush.xpose.msra.mxu0 0.0
    %160 = vmatpush.xpose.msra.mxu0 %v136
    %161 = vmatmul.f32.gmra.mxu0 %v137
    %v162 = vpop.f32.mrf.mxu0
    %v163 = vadd.f32 %v144, %v162
    %164 = vdwg.mxu0
    %vm165 = vcmask 57344
    %166 = vst.msk [vmem:[#allocation8] sm:$0x1] %vm165, %v163
    // Predicated region
    $region30: #{tpu_custom_call.1} parent=1 // pred_check
      _
    $region31: #{tpu_custom_call.1} parent=1 // pred_check_branch
      %168 = sbr.rel (0) target = $region33
    $region32: #{tpu_custom_call.1} parent=1 // pred_region
      %170 = vsyncadd [#allocation5], 0
      %s172 = sshll.u32 [#allocation8], 4
      %s173 = int_to_ptr.vmem [resolvable:$true] %s172
      %s174 = sshll.u32 %s5, 4
      %s175 = int_to_ptr.hbm [resolvable:$true] %s174
      %177 = dma.vmem_to_hbm [thread:$0]  %s173, 16, %s175, [#allocation5]
    $region33: #{tpu_custom_call.1} parent=1 // pred_fallthru
      _
    // Predicated region
    $region34: #{tpu_custom_call.1} parent=1 // pred_check
      _
    $region35: #{tpu_custom_call.1} parent=1 // pred_check_branch
      %179 = sbr.rel (0) target = $region37
    $region36: #{tpu_custom_call.1} parent=1 // pred_region
      %181 = dma.done [#allocation5], 16
    $region37: #{tpu_custom_call.1} parent=1 // pred_fallthru
      _
    %182 = vsyncpa [#allocation4], 1
    %183 = vsyncpa [#allocation7], 1
    %184 = vsyncpa [#allocation5], 1

</llo_original>
